<compile_context>
chip_gen: v7x
topology: tpu7x:2x2x1
jax: 0.10.0
libtpu: 0.0.40
codegen_flags: <defaults>
</compile_context>

<pallas_src>
import functools

import jax
import jax.numpy as jnp
from jax.experimental import pallas as pl
from jax.experimental.pallas import tpu as pltpu

INPUT_SIZE = 63
H1 = 64
H2 = 64
H3 = 32
OUTPUT_SIZE = 3
W4_LANE_PAD = 128  # final-layer weight columns padded to one full lane width


def _hand_mlp_kernel(x_ref, w1_ref, b1_ref, w2_ref, b2_ref,
                     w3_ref, b3_ref, w4_ref, b4_ref, o_ref):
    # Whole MLP fused per batch tile; intermediates live in VMEM/vregs only.
    x = x_ref[...]                                   # (TB, 63)
    h = jnp.dot(x, w1_ref[...], preferred_element_type=jnp.float32) + b1_ref[...]
    h = jnp.maximum(h, 0.0)
    h = jnp.dot(h, w2_ref[...], preferred_element_type=jnp.float32) + b2_ref[...]
    h = jnp.maximum(h, 0.0)
    h = jnp.dot(h, w3_ref[...], preferred_element_type=jnp.float32) + b3_ref[...]
    h = jnp.maximum(h, 0.0)
    y = jnp.dot(h, w4_ref[...], preferred_element_type=jnp.float32)  # (TB, 128)
    # Only the 3 real output columns go to HBM (narrow writeback).
    o_ref[...] = (y[:, :OUTPUT_SIZE] + b4_ref[...]).astype(o_ref.dtype)


def prepare_params(params):
    """One-time layout prep, hoisted out of the per-call path.

    The final-layer weight is lane-padded to 128 columns so the last matmul
    has a full-lane MXU output; the padded columns are exact zeros and are
    never stored to HBM."""
    w4p = jnp.zeros((H3, W4_LANE_PAD), jnp.float32).at[:, :OUTPUT_SIZE].set(params["w4"])
    return dict(w1=params["w1"], b1=params["b1"],
                w2=params["w2"], b2=params["b2"],
                w3=params["w3"], b3=params["b3"],
                w4p=w4p, b4=params["b4"])


def _round_up(n, m):
    return ((n + m - 1) // m) * m


@functools.partial(jax.jit, static_argnames=("tb",))
def hand_mlp_forward(x, prepped, *, tb=2048):
    """x: [B, 63] float32. prepped: output of prepare_params()."""
    B = x.shape[0]
    # Batch tile: multiple of 8, capped at `tb`; keep >= 2 grid steps when the
    # batch allows it so v7x can shard the "parallel" axis across both cores.
    if B <= 8:
        TB = B
    else:
        TB = int(min(tb, _round_up(pl.cdiv(B, 2), 8)))
    grid = (pl.cdiv(B, TB),)

    w1, b1 = prepped["w1"], prepped["b1"]
    w2, b2 = prepped["w2"], prepped["b2"]
    w3, b3 = prepped["w3"], prepped["b3"]
    w4p, b4 = prepped["w4p"], prepped["b4"]

    def resident(arr):
        # Constant block index -> weight/bias stays VMEM-resident across steps.
        return pl.BlockSpec(arr.shape, lambda i: (0, 0))

    flops_per_row = 2 * (INPUT_SIZE * H1 + H1 * H2 + H2 * H3 + H3 * OUTPUT_SIZE)
    io_bytes_per_row = 4 * (INPUT_SIZE + OUTPUT_SIZE)
    weight_bytes = 4 * (w1.size + b1.size + w2.size + b2.size +
                        w3.size + b3.size + w4p.size + b4.size)

    return pl.pallas_call(
        _hand_mlp_kernel,
        out_shape=jax.ShapeDtypeStruct((B, OUTPUT_SIZE), jnp.float32),
        grid=grid,
        in_specs=[
            pl.BlockSpec((TB, INPUT_SIZE), lambda i: (i, 0)),   # streamed x tiles
            resident(w1), resident(b1),
            resident(w2), resident(b2),
            resident(w3), resident(b3),
            resident(w4p), resident(b4),
        ],
        out_specs=pl.BlockSpec((TB, OUTPUT_SIZE), lambda i: (i, 0)),
        compiler_params=pltpu.CompilerParams(
            dimension_semantics=("parallel",)),
        cost_estimate=pl.CostEstimate(
            flops=int(flops_per_row) * B,
            transcendentals=0,
            bytes_accessed=int(io_bytes_per_row) * B + int(weight_bytes)),
    )(x, w1, b1, w2, b2, w3, b3, w4p, b4)


def init_params(key):
    """Deterministic init mimicking PyTorch nn.Linear default
    (U[-1/sqrt(fan_in), +1/sqrt(fan_in)]). Weights stored as [in, out]."""
    dims = [(INPUT_SIZE, H1), (H1, H2), (H2, H3), (H3, OUTPUT_SIZE)]
    params = {}
    for i, (fan_in, fan_out) in enumerate(dims, start=1):
        key, kw, kb = jax.random.split(key, 3)
        bound = 1.0 / jnp.sqrt(jnp.float32(fan_in))
        params[f"w{i}"] = jax.random.uniform(
            kw, (fan_in, fan_out), jnp.float32, -bound, bound)
        params[f"b{i}"] = jax.random.uniform(
            kb, (1, fan_out), jnp.float32, -bound, bound)
    return params


def hand_mlp_reference(x, params):
    h = jnp.maximum(x @ params["w1"] + params["b1"], 0.0)
    h = jnp.maximum(h @ params["w2"] + params["b2"], 0.0)
    h = jnp.maximum(h @ params["w3"] + params["b3"], 0.0)
    return h @ params["w4"] + params["b4"]


if __name__ == "__main__":
    key = jax.random.PRNGKey(0)
    key, kx = jax.random.split(key)

    params = init_params(key)
    prepped = prepare_params(params)          # one-time layout prep

    batch = 8
    x = jax.random.normal(kx, (batch, INPUT_SIZE), jnp.float32)
    out = jax.block_until_ready(hand_mlp_forward(x, prepped))
    ref = hand_mlp_reference(x, params)
    assert out.shape == (batch, OUTPUT_SIZE)
    assert jnp.allclose(out, ref, atol=1e-4, rtol=1e-4)

    # Non-multiple-of-tile batch: exercises the masked partial last block.
    key, kx2 = jax.random.split(key)
    x2 = jax.random.normal(kx2, (37, INPUT_SIZE), jnp.float32)
    out2 = jax.block_until_ready(hand_mlp_forward(x2, prepped))
    ref2 = hand_mlp_reference(x2, params)
    assert out2.shape == (37, OUTPUT_SIZE)
    assert jnp.allclose(out2, ref2, atol=1e-4, rtol=1e-4)

    print("KERNEL_OK")
</pallas_src>

<mosaic_0001>
module attributes {stable_mosaic.version = 11 : i64} {
  func.func @_hand_mlp_kernel(%arg0: i32, %arg1: memref<8x63xf32, #tpu.memory_space<vmem>>, %arg2: memref<63x64xf32, #tpu.memory_space<vmem>>, %arg3: memref<1x64xf32, #tpu.memory_space<vmem>>, %arg4: memref<64x64xf32, #tpu.memory_space<vmem>>, %arg5: memref<1x64xf32, #tpu.memory_space<vmem>>, %arg6: memref<64x32xf32, #tpu.memory_space<vmem>>, %arg7: memref<1x32xf32, #tpu.memory_space<vmem>>, %arg8: memref<32x128xf32, #tpu.memory_space<vmem>>, %arg9: memref<1x3xf32, #tpu.memory_space<vmem>>, %arg10: memref<8x3xf32, #tpu.memory_space<vmem>>) attributes {dimension_semantics = [#tpu.dimension_semantics<parallel>], iteration_bounds = array<i64: 1>, scalar_prefetch = 0 : i64, scratch_operands = 0 : i64, tpu.core_type = #tpu.core_type<tc>, window_params = [{transform_indices = @transform_0, window_bounds = array<i64: 8, 63>}, {pipeline_mode = #tpu.pipeline_mode<synchronous>, transform_indices = @transform_1, window_bounds = array<i64: 63, 64>}, {pipeline_mode = #tpu.pipeline_mode<synchronous>, transform_indices = @transform_2, window_bounds = array<i64: 1, 64>}, {pipeline_mode = #tpu.pipeline_mode<synchronous>, transform_indices = @transform_3, window_bounds = array<i64: 64, 64>}, {pipeline_mode = #tpu.pipeline_mode<synchronous>, transform_indices = @transform_4, window_bounds = array<i64: 1, 64>}, {pipeline_mode = #tpu.pipeline_mode<synchronous>, transform_indices = @transform_5, window_bounds = array<i64: 64, 32>}, {pipeline_mode = #tpu.pipeline_mode<synchronous>, transform_indices = @transform_6, window_bounds = array<i64: 1, 32>}, {pipeline_mode = #tpu.pipeline_mode<synchronous>, transform_indices = @transform_7, window_bounds = array<i64: 32, 128>}, {pipeline_mode = #tpu.pipeline_mode<synchronous>, transform_indices = @transform_8, window_bounds = array<i64: 1, 3>}, {transform_indices = @transform_9, window_bounds = array<i64: 8, 3>}]} {
    %c0 = arith.constant 0 : index
    %c0_0 = arith.constant 0 : index
    %0 = vector.load %arg1[%c0, %c0_0] : memref<8x63xf32, #tpu.memory_space<vmem>>, vector<8x63xf32>
    %c0_1 = arith.constant 0 : index
    %c0_2 = arith.constant 0 : index
    %1 = vector.load %arg2[%c0_1, %c0_2] : memref<63x64xf32, #tpu.memory_space<vmem>>, vector<63x64xf32>
    %cst = arith.constant dense<0.000000e+00> : vector<8x64xf32>
    %2 = tpu.matmul %0, %1, %cst {dimension_numbers = #tpu.dot_dimension_numbers<[1], [0], [0], [1], [0, 0, 1, 1], [], []>} : vector<8x63xf32>, vector<63x64xf32>, vector<8x64xf32> -> vector<8x64xf32>
    %c0_3 = arith.constant 0 : index
    %c0_4 = arith.constant 0 : index
    %3 = vector.load %arg3[%c0_3, %c0_4] : memref<1x64xf32, #tpu.memory_space<vmem>>, vector<1x64xf32>
    %4 = vector.broadcast %3 : vector<1x64xf32> to vector<8x64xf32>
    %5 = arith.addf %2, %4 : vector<8x64xf32>
    %cst_5 = arith.constant 0.000000e+00 : f32
    %6 = vector.broadcast %cst_5 : f32 to vector<8x64xf32>
    %7 = arith.maximumf %5, %6 : vector<8x64xf32>
    %c0_6 = arith.constant 0 : index
    %c0_7 = arith.constant 0 : index
    %8 = vector.load %arg4[%c0_6, %c0_7] : memref<64x64xf32, #tpu.memory_space<vmem>>, vector<64x64xf32>
    %cst_8 = arith.constant dense<0.000000e+00> : vector<8x64xf32>
    %9 = tpu.matmul %7, %8, %cst_8 {dimension_numbers = #tpu.dot_dimension_numbers<[1], [0], [0], [1], [0, 0, 1, 1], [], []>} : vector<8x64xf32>, vector<64x64xf32>, vector<8x64xf32> -> vector<8x64xf32>
    %c0_9 = arith.constant 0 : index
    %c0_10 = arith.constant 0 : index
    %10 = vector.load %arg5[%c0_9, %c0_10] : memref<1x64xf32, #tpu.memory_space<vmem>>, vector<1x64xf32>
    %11 = vector.broadcast %10 : vector<1x64xf32> to vector<8x64xf32>
    %12 = arith.addf %9, %11 : vector<8x64xf32>
    %cst_11 = arith.constant 0.000000e+00 : f32
    %13 = vector.broadcast %cst_11 : f32 to vector<8x64xf32>
    %14 = arith.maximumf %12, %13 : vector<8x64xf32>
    %c0_12 = arith.constant 0 : index
    %c0_13 = arith.constant 0 : index
    %15 = vector.load %arg6[%c0_12, %c0_13] : memref<64x32xf32, #tpu.memory_space<vmem>>, vector<64x32xf32>
    %cst_14 = arith.constant dense<0.000000e+00> : vector<8x32xf32>
    %16 = tpu.matmul %14, %15, %cst_14 {dimension_numbers = #tpu.dot_dimension_numbers<[1], [0], [0], [1], [0, 0, 1, 1], [], []>} : vector<8x64xf32>, vector<64x32xf32>, vector<8x32xf32> -> vector<8x32xf32>
    %c0_15 = arith.constant 0 : index
    %c0_16 = arith.constant 0 : index
    %17 = vector.load %arg7[%c0_15, %c0_16] : memref<1x32xf32, #tpu.memory_space<vmem>>, vector<1x32xf32>
    %18 = vector.broadcast %17 : vector<1x32xf32> to vector<8x32xf32>
    %19 = arith.addf %16, %18 : vector<8x32xf32>
    %cst_17 = arith.constant 0.000000e+00 : f32
    %20 = vector.broadcast %cst_17 : f32 to vector<8x32xf32>
    %21 = arith.maximumf %19, %20 : vector<8x32xf32>
    %c0_18 = arith.constant 0 : index
    %c0_19 = arith.constant 0 : index
    %22 = vector.load %arg8[%c0_18, %c0_19] : memref<32x128xf32, #tpu.memory_space<vmem>>, vector<32x128xf32>
    %cst_20 = arith.constant dense<0.000000e+00> : vector<8x128xf32>
    %23 = tpu.matmul %21, %22, %cst_20 {dimension_numbers = #tpu.dot_dimension_numbers<[1], [0], [0], [1], [0, 0, 1, 1], [], []>} : vector<8x32xf32>, vector<32x128xf32>, vector<8x128xf32> -> vector<8x128xf32>
    %24 = vector.extract_strided_slice %23 {offsets = [0, 0], sizes = [8, 3], strides = [1, 1]} : vector<8x128xf32> to vector<8x3xf32>
    %c0_21 = arith.constant 0 : index
    %c0_22 = arith.constant 0 : index
    %25 = vector.load %arg9[%c0_21, %c0_22] : memref<1x3xf32, #tpu.memory_space<vmem>>, vector<1x3xf32>
    %26 = vector.broadcast %25 : vector<1x3xf32> to vector<8x3xf32>
    %27 = arith.addf %24, %26 : vector<8x3xf32>
    %c0_23 = arith.constant 0 : index
    %c0_24 = arith.constant 0 : index
    %28 = vector.load %arg10[%c0_23, %c0_24] : memref<8x3xf32, #tpu.memory_space<vmem>>, vector<8x3xf32>
    tpu.vector_store %arg10[%c0_23, %c0_24], %27 {strides = array<i32>} : memref<8x3xf32, #tpu.memory_space<vmem>>, vector<8x3xf32>,
    return
  }
  func.func @transform_0(%arg0: i32) -> (i32, i32) {
    %c0_i32 = arith.constant 0 : i32
    %c0_i32_0 = arith.constant 0 : i32
    return %arg0, %c0_i32 : i32, i32
  }
  func.func @transform_1(%arg0: i32) -> (i32, i32) {
    %c0_i32 = arith.constant 0 : i32
    %c0_i32_0 = arith.constant 0 : i32
    %c0_i32_1 = arith.constant 0 : i32
    return %c0_i32, %c0_i32_0 : i32, i32
  }
  func.func @transform_2(%arg0: i32) -> (i32, i32) {
    %c0_i32 = arith.constant 0 : i32
    %c0_i32_0 = arith.constant 0 : i32
    %c0_i32_1 = arith.constant 0 : i32
    return %c0_i32, %c0_i32_0 : i32, i32
  }
  func.func @transform_3(%arg0: i32) -> (i32, i32) {
    %c0_i32 = arith.constant 0 : i32
    %c0_i32_0 = arith.constant 0 : i32
    %c0_i32_1 = arith.constant 0 : i32
    return %c0_i32, %c0_i32_0 : i32, i32
  }
  func.func @transform_4(%arg0: i32) -> (i32, i32) {
    %c0_i32 = arith.constant 0 : i32
    %c0_i32_0 = arith.constant 0 : i32
    %c0_i32_1 = arith.constant 0 : i32
    return %c0_i32, %c0_i32_0 : i32, i32
  }
  func.func @transform_5(%arg0: i32) -> (i32, i32) {
    %c0_i32 = arith.constant 0 : i32
    %c0_i32_0 = arith.constant 0 : i32
    %c0_i32_1 = arith.constant 0 : i32
    return %c0_i32, %c0_i32_0 : i32, i32
  }
  func.func @transform_6(%arg0: i32) -> (i32, i32) {
    %c0_i32 = arith.constant 0 : i32
    %c0_i32_0 = arith.constant 0 : i32
    %c0_i32_1 = arith.constant 0 : i32
    return %c0_i32, %c0_i32_0 : i32, i32
  }
  func.func @transform_7(%arg0: i32) -> (i32, i32) {
    %c0_i32 = arith.constant 0 : i32
    %c0_i32_0 = arith.constant 0 : i32
    %c0_i32_1 = arith.constant 0 : i32
    return %c0_i32, %c0_i32_0 : i32, i32
  }
  func.func @transform_8(%arg0: i32) -> (i32, i32) {
    %c0_i32 = arith.constant 0 : i32
    %c0_i32_0 = arith.constant 0 : i32
    %c0_i32_1 = arith.constant 0 : i32
    return %c0_i32, %c0_i32_0 : i32, i32
  }
  func.func @transform_9(%arg0: i32) -> (i32, i32) {
    %c0_i32 = arith.constant 0 : i32
    %c0_i32_0 = arith.constant 0 : i32
    return %arg0, %c0_i32 : i32, i32
  }
}

</mosaic_0001>

<llo_original>
// kernel: hand_mlp_forward.1
$region0: #{hand_mlp_forward.1}
  #allocation0 [shape = 'u32[]', space=smem, size = 0x4, offset = 0x4, fixed_abs, tag = 'smem constant byte address 0x4 - core index']
  #allocation1 [shape = 'u32[144,128]{1,0:T(1,128)}', space=vmem, size = 0x12000, scoped, tag = 'internal scratch']
  %s0 = inlined_call_operand.vmem [shape: f32[8,63], index: 0, kind: input, shape index: {}]
  %s1 = inlined_call_operand.vmem [shape: f32[63,64], index: 1, kind: input, shape index: {}]
  %s2 = inlined_call_operand.vmem [shape: f32[1,64], index: 2, kind: input, shape index: {}]
  %s3 = inlined_call_operand.hbm [shape: f32[64,64], index: 3, kind: input, shape index: {}]
  %s4 = inlined_call_operand.vmem [shape: f32[1,64], index: 4, kind: input, shape index: {}]
  %s5 = inlined_call_operand.vmem [shape: f32[64,32], index: 5, kind: input, shape index: {}]
  %s6 = inlined_call_operand.vmem [shape: f32[1,32], index: 6, kind: input, shape index: {}]
  %s7 = inlined_call_operand.vmem [shape: f32[32,128], index: 7, kind: input, shape index: {}]
  %s8 = inlined_call_operand.vmem [shape: f32[1,3], index: 8, kind: input, shape index: {}]
  %s9 = inlined_call_operand.vmem [shape: f32[8,3], index: 9, kind: output, shape index: {}]
  %s10 = sld [smem:[#allocation0]]
  $region50: #{hand_mlp_forward.1} parent=0
    _
  %s12 = ssub.s32 1, %s10
  %s13 = scalar_select 0, %s12, %s10
  $region1: #{hand_mlp_forward.1} parent=0
    #allocation2 [shape = 'u8[32768]{0}', space=vmem, size = 0x8000, scoped, tag = 'input window, operand 3, single buffered']
    #allocation3 [shape = 's32[1]{0}', space=sflag, size = 0x4, scoped, tag = 'scoped memory for hand_mlp_forward.1']
    %14 = vsyncpa [#allocation3], 0
    // Predicated region
    $region2: #{hand_mlp_forward.1} parent=1 // pred_check
      _
    $region3: #{hand_mlp_forward.1} parent=1 // pred_check_branch
      %16 = sbr.rel (0) target = $region5
    $region4: #{hand_mlp_forward.1} parent=1 // pred_region
      _
    $region5: #{hand_mlp_forward.1} parent=1 // pred_fallthru
      _
    // Predicated region
    $region6: #{hand_mlp_forward.1} parent=1 // pred_check
      _
    $region7: #{hand_mlp_forward.1} parent=1 // pred_check_branch
      %18 = sbr.rel (0) target = $region9
    $region8: #{hand_mlp_forward.1} parent=1 // pred_region
      _
    $region9: #{hand_mlp_forward.1} parent=1 // pred_fallthru
      _
    // Predicated region
    $region10: #{hand_mlp_forward.1} parent=1 // pred_check
      _
    $region11: #{hand_mlp_forward.1} parent=1 // pred_check_branch
      %20 = sbr.rel (0) target = $region13
    $region12: #{hand_mlp_forward.1} parent=1 // pred_region
      _
    $region13: #{hand_mlp_forward.1} parent=1 // pred_fallthru
      _
    // Predicated region
    $region14: #{hand_mlp_forward.1} parent=1 // pred_check
      _
    $region15: #{hand_mlp_forward.1} parent=1 // pred_check_branch
      %22 = sbr.rel (0) target = $region17
    $region16: #{hand_mlp_forward.1} parent=1 // pred_region
      %s24 = ssub.s32 1024, 1024
      %25 = vsyncadd [#allocation3], %s24
      %s26 = sshll.u32 [#allocation2], 4
      %s27 = int_to_ptr.vmem [resolvable:$true] %s26
      %32 = dma.hbm_to_vmem [thread:$0]  %s3, 1024, %s27, [#allocation3], 128, 128, 8
    $region17: #{hand_mlp_forward.1} parent=1 // pred_fallthru
      _
    // Predicated region
    $region18: #{hand_mlp_forward.1} parent=1 // pred_check
      _
    $region19: #{hand_mlp_forward.1} parent=1 // pred_check_branch
      %34 = sbr.rel (0) target = $region21
    $region20: #{hand_mlp_forward.1} parent=1 // pred_region
      _
    $region21: #{hand_mlp_forward.1} parent=1 // pred_fallthru
      _
    // Predicated region
    $region22: #{hand_mlp_forward.1} parent=1 // pred_check
      _
    $region23: #{hand_mlp_forward.1} parent=1 // pred_check_branch
      %36 = sbr.rel (0) target = $region25
    $region24: #{hand_mlp_forward.1} parent=1 // pred_region
      _
    $region25: #{hand_mlp_forward.1} parent=1 // pred_fallthru
      _
    // Predicated region
    $region26: #{hand_mlp_forward.1} parent=1 // pred_check
      _
    $region27: #{hand_mlp_forward.1} parent=1 // pred_check_branch
      %38 = sbr.rel (0) target = $region29
    $region28: #{hand_mlp_forward.1} parent=1 // pred_region
      _
    $region29: #{hand_mlp_forward.1} parent=1 // pred_fallthru
      _
    // Predicated region
    $region30: #{hand_mlp_forward.1} parent=1 // pred_check
      _
    $region31: #{hand_mlp_forward.1} parent=1 // pred_check_branch
      %40 = sbr.rel (0) target = $region33
    $region32: #{hand_mlp_forward.1} parent=1 // pred_region
      _
    $region33: #{hand_mlp_forward.1} parent=1 // pred_fallthru
      _
    // Predicated region
    $region34: #{hand_mlp_forward.1} parent=1 // pred_check
      _
    $region35: #{hand_mlp_forward.1} parent=1 // pred_check_branch
      %42 = sbr.rel (0) target = $region37
    $region36: #{hand_mlp_forward.1} parent=1 // pred_region
      _
    $region37: #{hand_mlp_forward.1} parent=1 // pred_fallthru
      _
    // Predicated region
    $region38: #{hand_mlp_forward.1} parent=1 // pred_check
      _
    $region39: #{hand_mlp_forward.1} parent=1 // pred_check_branch
      %44 = sbr.rel (0) target = $region41
    $region40: #{hand_mlp_forward.1} parent=1 // pred_region
      %45 = dma.done [#allocation3], 1024
    $region41: #{hand_mlp_forward.1} parent=1 // pred_fallthru
      _
    %v46 = vld [vmem:[%s0] sm:$0xff]
    %v47 = vld [vmem:[%s1] sm:$0xff]
    %v48 = vld [vmem:[%s1 + $0x8] sm:$0xff]
    %v49 = vld [vmem:[%s1 + $0x10] sm:$0xff]
    %v50 = vld [vmem:[%s1 + $0x18] sm:$0xff]
    %v51 = vld [vmem:[%s1 + $0x20] sm:$0xff]
    %v52 = vld [vmem:[%s1 + $0x28] sm:$0xff]
    %v53 = vld [vmem:[%s1 + $0x30] sm:$0xff]
    %v54 = vld [vmem:[%s1 + $0x38] sm:$0x7f]
    %v55 = vld [vmem:[%s2] sm:$0x1]
    %v57 = vlaneseq
    %v58 = vshrl.u32 %v57, 7
    %v59 = vsub.s32 0, %v58
    %v60 = vrot.slane %v55, %v59
    %vm62 = vcmask 515072
    %v64 = vsel %vm62, %v46, 0
    %vm66 = vcmask 1046528
    %v68 = vsel %vm66, %v54, 0
    %70 = vmatprep.subr.mxu0 0.0
    %71 = vmatpush1.msra.mxu0 %v47
    %72 = vmatprep.subr.mxu0 0.0
    %73 = vmatpush1.msra.mxu0 %v48
    %74 = vmatprep.subr.mxu0 0.0
    %75 = vmatpush1.msra.mxu0 %v49
    %76 = vmatprep.subr.mxu0 0.0
    %77 = vmatpush1.msra.mxu0 %v50
    %78 = vmatprep.subr.mxu0 0.0
    %79 = vmatpush1.msra.mxu0 %v51
    %80 = vmatprep.subr.mxu0 0.0
    %81 = vmatpush1.msra.mxu0 %v52
    %82 = vmatprep.subr.mxu0 0.0
    %83 = vmatpush1.msra.mxu0 %v53
    %84 = vmatprep.subr.mxu0 0.0
    %85 = vmatpush1.msra.mxu0 %v68
    %86 = vmatprep.subr.mxu0 0.0
    %87 = vmatpush1.msra.mxu0 0.0
    %88 = vmatprep.subr.mxu0 0.0
    %89 = vmatpush1.msra.mxu0 0.0
    %90 = vmatprep.subr.mxu0 0.0
    %91 = vmatpush1.msra.mxu0 0.0
    %92 = vmatprep.subr.mxu0 0.0
    %93 = vmatpush1.msra.mxu0 0.0
    %94 = vmatprep.subr.mxu0 0.0
    %95 = vmatpush1.msra.mxu0 0.0
    %96 = vmatprep.subr.mxu0 0.0
    %97 = vmatpush1.msra.mxu0 0.0
    %98 = vmatprep.subr.mxu0 0.0
    %99 = vmatpush1.msra.mxu0 0.0
    %100 = vmatprep.subr.mxu0 0.0
    %101 = vmatpush1.msra.mxu0 0.0
    %102 = vmatprep.subr.mxu0 0.0
    %103 = vmatpush1.msra.mxu0 0.0
    %104 = vmatprep.subr.mxu0 0.0
    %105 = vmatpush1.msra.mxu0 0.0
    %106 = vmatprep.subr.mxu0 0.0
    %107 = vmatpush1.msra.mxu0 0.0
    %108 = vmatprep.subr.mxu0 0.0
    %109 = vmatpush1.msra.mxu0 0.0
    %110 = vmatprep.subr.mxu0 0.0
    %111 = vmatpush1.msra.mxu0 0.0
    %112 = vmatprep.subr.mxu0 0.0
    %113 = vmatpush1.msra.mxu0 0.0
    %114 = vmatprep.subr.mxu0 0.0
    %115 = vmatpush1.msra.mxu0 0.0
    %116 = vmatprep.subr.mxu0 0.0
    %117 = vmatpush1.msra.mxu0 0.0
    %118 = vmatprep.subr.mxu0 0.0
    %119 = vmatpush1.msra.mxu0 0.0
    %120 = vmatprep.subr.mxu0 0.0
    %121 = vmatpush1.msra.mxu0 0.0
    %122 = vmatprep.subr.mxu0 0.0
    %123 = vmatpush1.msra.mxu0 0.0
    %124 = vmatprep.subr.mxu0 0.0
    %125 = vmatpush1.msra.mxu0 0.0
    %126 = vmatprep.subr.mxu0 0.0
    %127 = vmatpush1.msra.mxu0 0.0
    %128 = vmatprep.subr.mxu0 0.0
    %129 = vmatpush1.msra.mxu0 0.0
    %130 = vmatprep.subr.mxu0 0.0
    %131 = vmatpush1.msra.mxu0 0.0
    %132 = vmatprep.subr.mxu0 0.0
    %133 = vmatpush1.msra.mxu0 0.0
    %134 = vmatprep.mubr.f32.mxu0 0.0
    %135 = vmatmul.mubr.f32.gmra.mrb[0].mxu0 %v64
    %v136 = vpop.f32.mrb[0].mxu0
    %v137 = vadd.f32 %v60, %v136
    %v138 = vpop.f32.mrb[0].mxu0
    %139 = vdwg.mxu0
    %v140 = vmax.f32 %v137, 0.0
    %v141 = vld [vmem:[#allocation2] sm:$0xff]
    %v142 = vld [vmem:[#allocation2 + $0x8] sm:$0xff]
    %v143 = vld [vmem:[#allocation2 + $0x10] sm:$0xff]
    %v144 = vld [vmem:[#allocation2 + $0x18] sm:$0xff]
    %v145 = vld [vmem:[#allocation2 + $0x20] sm:$0xff]
    %v146 = vld [vmem:[#allocation2 + $0x28] sm:$0xff]
    %v147 = vld [vmem:[#allocation2 + $0x30] sm:$0xff]
    %v148 = vld [vmem:[#allocation2 + $0x38] sm:$0xff]
    %v149 = vld [vmem:[%s4] sm:$0x1]
    %v151 = vlaneseq
    %v152 = vshrl.u32 %v151, 7
    %v153 = vsub.s32 0, %v152
    %v154 = vrot.slane %v149, %v153
    %vm156 = vcmask 523264
    %v158 = vsel %vm156, %v140, 0
    %160 = vmatprep.subr.mxu0 0.0
    %161 = vmatpush1.msra.mxu0 %v141
    %162 = vmatprep.subr.mxu0 0.0
    %163 = vmatpush1.msra.mxu0 %v142
    %164 = vmatprep.subr.mxu0 0.0
    %165 = vmatpush1.msra.mxu0 %v143
    %166 = vmatprep.subr.mxu0 0.0
    %167 = vmatpush1.msra.mxu0 %v144
    %168 = vmatprep.subr.mxu0 0.0
    %169 = vmatpush1.msra.mxu0 %v145
    %170 = vmatprep.subr.mxu0 0.0
    %171 = vmatpush1.msra.mxu0 %v146
    %172 = vmatprep.subr.mxu0 0.0
    %173 = vmatpush1.msra.mxu0 %v147
    %174 = vmatprep.subr.mxu0 0.0
    %175 = vmatpush1.msra.mxu0 %v148
    %176 = vmatprep.subr.mxu0 0.0
    %177 = vmatpush1.msra.mxu0 0.0
    %178 = vmatprep.subr.mxu0 0.0
    %179 = vmatpush1.msra.mxu0 0.0
    %180 = vmatprep.subr.mxu0 0.0
    %181 = vmatpush1.msra.mxu0 0.0
    %182 = vmatprep.subr.mxu0 0.0
    %183 = vmatpush1.msra.mxu0 0.0
    %184 = vmatprep.subr.mxu0 0.0
    %185 = vmatpush1.msra.mxu0 0.0
    %186 = vmatprep.subr.mxu0 0.0
    %187 = vmatpush1.msra.mxu0 0.0
    %188 = vmatprep.subr.mxu0 0.0
    %189 = vmatpush1.msra.mxu0 0.0
    %190 = vmatprep.subr.mxu0 0.0
    %191 = vmatpush1.msra.mxu0 0.0
    %192 = vmatprep.subr.mxu0 0.0
    %193 = vmatpush1.msra.mxu0 0.0
    %194 = vmatprep.subr.mxu0 0.0
    %195 = vmatpush1.msra.mxu0 0.0
    %196 = vmatprep.subr.mxu0 0.0
    %197 = vmatpush1.msra.mxu0 0.0
    %198 = vmatprep.subr.mxu0 0.0
    %199 = vmatpush1.msra.mxu0 0.0
    %200 = vmatprep.subr.mxu0 0.0
    %201 = vmatpush1.msra.mxu0 0.0
    %202 = vmatprep.subr.mxu0 0.0
    %203 = vmatpush1.msra.mxu0 0.0
    %204 = vmatprep.subr.mxu0 0.0
    %205 = vmatpush1.msra.mxu0 0.0
    %206 = vmatprep.subr.mxu0 0.0
    %207 = vmatpush1.msra.mxu0 0.0
    %208 = vmatprep.subr.mxu0 0.0
    %209 = vmatpush1.msra.mxu0 0.0
    %210 = vmatprep.subr.mxu0 0.0
    %211 = vmatpush1.msra.mxu0 0.0
    %212 = vmatprep.subr.mxu0 0.0
    %213 = vmatpush1.msra.mxu0 0.0
    %214 = vmatprep.subr.mxu0 0.0
    %215 = vmatpush1.msra.mxu0 0.0
    %216 = vmatprep.subr.mxu0 0.0
    %217 = vmatpush1.msra.mxu0 0.0
    %218 = vmatprep.subr.mxu0 0.0
    %219 = vmatpush1.msra.mxu0 0.0
    %220 = vmatprep.subr.mxu0 0.0
    %221 = vmatpush1.msra.mxu0 0.0
    %222 = vmatprep.subr.mxu0 0.0
    %223 = vmatpush1.msra.mxu0 0.0
    %224 = vmatprep.mubr.f32.mxu0 0.0
    %225 = vmatmul.mubr.f32.gmra.mrb[0].mxu0 %v158
    %v226 = vpop.f32.mrb[0].mxu0
    %v227 = vadd.f32 %v154, %v226
    %v228 = vpop.f32.mrb[0].mxu0
    %229 = vdwg.mxu0
    %v230 = vmax.f32 %v227, 0.0
    %v231 = vld [vmem:[%s5] sm:$0xff]
    %v232 = vld [vmem:[%s5 + $0x8] sm:$0xff]
    %v233 = vld [vmem:[%s5 + $0x10] sm:$0xff]
    %v234 = vld [vmem:[%s5 + $0x18] sm:$0xff]
    %v235 = vld [vmem:[%s5 + $0x20] sm:$0xff]
    %v236 = vld [vmem:[%s5 + $0x28] sm:$0xff]
    %v237 = vld [vmem:[%s5 + $0x30] sm:$0xff]
    %v238 = vld [vmem:[%s5 + $0x38] sm:$0xff]
    %v239 = vld [vmem:[%s6] sm:$0x1]
    %v241 = vlaneseq
    %v242 = vshrl.u32 %v241, 7
    %v243 = vsub.s32 0, %v242
    %v244 = vrot.slane %v239, %v243
    %v247 = vsel %vm156, %v230, 0
    %249 = vmatprep.subr.mxu0 0.0
    %250 = vmatpush1.msra.mxu0 %v231
    %251 = vmatprep.subr.mxu0 0.0
    %252 = vmatpush1.msra.mxu0 %v232
    %253 = vmatprep.subr.mxu0 0.0
    %254 = vmatpush1.msra.mxu0 %v233
    %255 = vmatprep.subr.mxu0 0.0
    %256 = vmatpush1.msra.mxu0 %v234
    %257 = vmatprep.subr.mxu0 0.0
    %258 = vmatpush1.msra.mxu0 %v235
    %259 = vmatprep.subr.mxu0 0.0
    %260 = vmatpush1.msra.mxu0 %v236
    %261 = vmatprep.subr.mxu0 0.0
    %262 = vmatpush1.msra.mxu0 %v237
    %263 = vmatprep.subr.mxu0 0.0
    %264 = vmatpush1.msra.mxu0 %v238
    %265 = vmatprep.subr.mxu0 0.0
    %266 = vmatpush1.msra.mxu0 0.0
    %267 = vmatprep.subr.mxu0 0.0
    %268 = vmatpush1.msra.mxu0 0.0
    %269 = vmatprep.subr.mxu0 0.0
    %270 = vmatpush1.msra.mxu0 0.0
    %271 = vmatprep.subr.mxu0 0.0
    %272 = vmatpush1.msra.mxu0 0.0
    %273 = vmatprep.subr.mxu0 0.0
    %274 = vmatpush1.msra.mxu0 0.0
    %275 = vmatprep.subr.mxu0 0.0
    %276 = vmatpush1.msra.mxu0 0.0
    %277 = vmatprep.subr.mxu0 0.0
    %278 = vmatpush1.msra.mxu0 0.0
    %279 = vmatprep.subr.mxu0 0.0
    %280 = vmatpush1.msra.mxu0 0.0
    %281 = vmatprep.subr.mxu0 0.0
    %282 = vmatpush1.msra.mxu0 0.0
    %283 = vmatprep.subr.mxu0 0.0
    %284 = vmatpush1.msra.mxu0 0.0
    %285 = vmatprep.subr.mxu0 0.0
    %286 = vmatpush1.msra.mxu0 0.0
    %287 = vmatprep.subr.mxu0 0.0
    %288 = vmatpush1.msra.mxu0 0.0
    %289 = vmatprep.subr.mxu0 0.0
    %290 = vmatpush1.msra.mxu0 0.0
    %291 = vmatprep.subr.mxu0 0.0
    %292 = vmatpush1.msra.mxu0 0.0
    %293 = vmatprep.subr.mxu0 0.0
    %294 = vmatpush1.msra.mxu0 0.0
    %295 = vmatprep.subr.mxu0 0.0
    %296 = vmatpush1.msra.mxu0 0.0
    %297 = vmatprep.subr.mxu0 0.0
    %298 = vmatpush1.msra.mxu0 0.0
    %299 = vmatprep.subr.mxu0 0.0
    %300 = vmatpush1.msra.mxu0 0.0
    %301 = vmatprep.subr.mxu0 0.0
    %302 = vmatpush1.msra.mxu0 0.0
    %303 = vmatprep.subr.mxu0 0.0
    %304 = vmatpush1.msra.mxu0 0.0
    %305 = vmatprep.subr.mxu0 0.0
    %306 = vmatpush1.msra.mxu0 0.0
    %307 = vmatprep.subr.mxu0 0.0
    %308 = vmatpush1.msra.mxu0 0.0
    %309 = vmatprep.subr.mxu0 0.0
    %310 = vmatpush1.msra.mxu0 0.0
    %311 = vmatprep.subr.mxu0 0.0
    %312 = vmatpush1.msra.mxu0 0.0
    %313 = vmatprep.mubr.f32.mxu0 0.0
    %314 = vmatmul.mubr.f32.gmra.mrb[0].mxu0 %v247
    %v315 = vpop.f32.mrb[0].mxu0
    %v316 = vadd.f32 %v244, %v315
    %v317 = vpop.f32.mrb[0].mxu0
    %318 = vdwg.mxu0
    %v319 = vmax.f32 %v316, 0.0
    %v320 = vld [vmem:[%s7] sm:$0xff]
    %v321 = vld [vmem:[%s7 + $0x8] sm:$0xff]
    %v322 = vld [vmem:[%s7 + $0x10] sm:$0xff]
    %v323 = vld [vmem:[%s7 + $0x18] sm:$0xff]
    %vm324 = vcmask 261120
    %v326 = vsel %vm324, %v319, 0
    %328 = vmatprep.subr.mxu0 0.0
    %329 = vmatpush1.msra.mxu0 %v320
    %330 = vmatprep.subr.mxu0 0.0
    %331 = vmatpush1.msra.mxu0 %v321
    %332 = vmatprep.subr.mxu0 0.0
    %333 = vmatpush1.msra.mxu0 %v322
    %334 = vmatprep.subr.mxu0 0.0
    %335 = vmatpush1.msra.mxu0 %v323
    %336 = vmatprep.subr.mxu0 0.0
    %337 = vmatpush1.msra.mxu0 0.0
    %338 = vmatprep.subr.mxu0 0.0
    %339 = vmatpush1.msra.mxu0 0.0
    %340 = vmatprep.subr.mxu0 0.0
    %341 = vmatpush1.msra.mxu0 0.0
    %342 = vmatprep.subr.mxu0 0.0
    %343 = vmatpush1.msra.mxu0 0.0
    %344 = vmatprep.subr.mxu0 0.0
    %345 = vmatpush1.msra.mxu0 0.0
    %346 = vmatprep.subr.mxu0 0.0
    %347 = vmatpush1.msra.mxu0 0.0
    %348 = vmatprep.subr.mxu0 0.0
    %349 = vmatpush1.msra.mxu0 0.0
    %350 = vmatprep.subr.mxu0 0.0
    %351 = vmatpush1.msra.mxu0 0.0
    %352 = vmatprep.subr.mxu0 0.0
    %353 = vmatpush1.msra.mxu0 0.0
    %354 = vmatprep.subr.mxu0 0.0
    %355 = vmatpush1.msra.mxu0 0.0
    %356 = vmatprep.subr.mxu0 0.0
    %357 = vmatpush1.msra.mxu0 0.0
    %358 = vmatprep.subr.mxu0 0.0
    %359 = vmatpush1.msra.mxu0 0.0
    %360 = vmatprep.subr.mxu0 0.0
    %361 = vmatpush1.msra.mxu0 0.0
    %362 = vmatprep.subr.mxu0 0.0
    %363 = vmatpush1.msra.mxu0 0.0
    %364 = vmatprep.subr.mxu0 0.0
    %365 = vmatpush1.msra.mxu0 0.0
    %366 = vmatprep.subr.mxu0 0.0
    %367 = vmatpush1.msra.mxu0 0.0
    %368 = vmatprep.subr.mxu0 0.0
    %369 = vmatpush1.msra.mxu0 0.0
    %370 = vmatprep.subr.mxu0 0.0
    %371 = vmatpush1.msra.mxu0 0.0
    %372 = vmatprep.subr.mxu0 0.0
    %373 = vmatpush1.msra.mxu0 0.0
    %374 = vmatprep.subr.mxu0 0.0
    %375 = vmatpush1.msra.mxu0 0.0
    %376 = vmatprep.subr.mxu0 0.0
    %377 = vmatpush1.msra.mxu0 0.0
    %378 = vmatprep.subr.mxu0 0.0
    %379 = vmatpush1.msra.mxu0 0.0
    %380 = vmatprep.subr.mxu0 0.0
    %381 = vmatpush1.msra.mxu0 0.0
    %382 = vmatprep.subr.mxu0 0.0
    %383 = vmatpush1.msra.mxu0 0.0
    %384 = vmatprep.subr.mxu0 0.0
    %385 = vmatpush1.msra.mxu0 0.0
    %386 = vmatprep.subr.mxu0 0.0
    %387 = vmatpush1.msra.mxu0 0.0
    %388 = vmatprep.subr.mxu0 0.0
    %389 = vmatpush1.msra.mxu0 0.0
    %390 = vmatprep.subr.mxu0 0.0
    %391 = vmatpush1.msra.mxu0 0.0
    %392 = vmatprep.mubr.f32.mxu0 0.0
    %393 = vmatmul.mubr.f32.gmra.mrb[0].mxu0 %v326
    %v394 = vpop.f32.mrb[0].mxu0
    %v395 = vadd.f32 0.0, %v394
    %v396 = vpop.f32.mrb[0].mxu0
    %397 = vdwg.mxu0
    %v398 = vld [vmem:[%s8] sm:$0x1]
    %v400 = vlaneseq
    %v401 = vshrl.u32 %v400, 7
    %v402 = vsub.s32 0, %v401
    %v403 = vrot.slane %v398, %v402
    %v405 = vadd.f32 %v395, %v403
    %vm406 = vcmask 23552
    %407 = vst.msk [vmem:[%s9] sm:$0xff] %vm406, %v405
    // Predicated region
    $region42: #{hand_mlp_forward.1} parent=1 // pred_check
      _
    $region43: #{hand_mlp_forward.1} parent=1 // pred_check_branch
      %409 = sbr.rel (0) target = $region45
    $region44: #{hand_mlp_forward.1} parent=1 // pred_region
      _
    $region45: #{hand_mlp_forward.1} parent=1 // pred_fallthru
      _
    // Predicated region
    $region46: #{hand_mlp_forward.1} parent=1 // pred_check
      _
    $region47: #{hand_mlp_forward.1} parent=1 // pred_check_branch
      %411 = sbr.rel (0) target = $region49
    $region48: #{hand_mlp_forward.1} parent=1 // pred_region
      _
    $region49: #{hand_mlp_forward.1} parent=1 // pred_fallthru
      _
    %412 = vsyncpa [#allocation3], 1

</llo_original>
